<compile_context>
chip_gen: v5e
topology: v5e:2x2
jax: 0.10.0
libtpu: 0.0.40
codegen_flags: <defaults>
</compile_context>

<pallas_src>
import jax
import jax.numpy as jnp
from jax.experimental import pallas as pl
from jax.experimental.pallas import tpu as pltpu

LANE = 128


def _round_up(x: int, m: int) -> int:
    return (x + m - 1) // m * m


def make_bmm_v1_kernel(num_classes: int):
    """Build the fused MLP kernel; num_classes is a static Python value."""

    def kernel(xt_ref, w1_ref, b1_ref, w2_ref, b2_ref, w3_ref, b3_ref, o_ref):
        xt = xt_ref[...]                                   # (D, TB), batch on lanes

        # fc1 + ReLU : (H_pad, D) @ (D, TB) -> (H_pad, TB)
        h1 = jnp.dot(w1_ref[...], xt, preferred_element_type=jnp.float32)
        h1 = jnp.maximum(h1 + b1_ref[...], 0.0)            # (H_pad,1) lane-broadcast

        # fc2 + ReLU : (N2_pad, H_pad) @ (H_pad, TB) -> (N2_pad, TB)
        h2 = jnp.dot(w2_ref[...], h1, preferred_element_type=jnp.float32)
        h2 = jnp.maximum(h2 + b2_ref[...], 0.0)

        # fc3 (out_features = 1): keep it off the MXU — VPU mul + sublane reduce.
        z = jnp.sum(h2 * w3_ref[...], axis=0, keepdims=True) + b3_ref[0, 0]  # (1, TB)

        # Sigmoid: exp on EUP, exact reciprocal (approx=True would change numerics).
        y = pl.reciprocal(1.0 + jnp.exp(-z))               # (1, TB)

        if num_classes == 2:                               # static branch
            y = 2.0 * (y - 0.5)

        o_ref[...] = y.astype(o_ref.dtype)                 # lane-dense store

    return kernel


def init_params(key, feature_dim):
    """Deterministic synthetic init matching nn.Linear (PyTorch-style) shapes."""
    H = feature_dim // 2
    ks = jax.random.split(key, 6)
    w1 = jax.random.normal(ks[0], (H, feature_dim), jnp.float32) * 0.1
    b1 = jax.random.normal(ks[1], (1, H), jnp.float32) * 0.1
    w2 = jax.random.normal(ks[2], (10, H), jnp.float32) * 0.1
    b2 = jax.random.normal(ks[3], (1, 10), jnp.float32) * 0.1
    w3 = jax.random.normal(ks[4], (1, 10), jnp.float32) * 0.1
    b3 = jax.random.normal(ks[5], (1, 1), jnp.float32) * 0.1
    return (w1, b1, w2, b2, w3, b3)


def prepare_params(params):
    """One-time host-side layout plumbing: zero-pad tiny dims to the 128 lane grain.

    Zero padding is exact: padded fc1/fc2 rows produce ReLU(0)=0 activations and the
    corresponding fc3 weights are 0, so the result is bit-for-bit the unpadded math.
    """
    w1, b1, w2, b2, w3, b3 = params
    H, D = w1.shape
    N2 = w2.shape[0]
    H_pad = _round_up(H, LANE)
    N2_pad = _round_up(N2, LANE)

    w1p = jnp.zeros((H_pad, D), jnp.float32).at[:H, :].set(w1)
    b1p = jnp.zeros((H_pad, 1), jnp.float32).at[:H, 0].set(b1.reshape(-1))
    w2p = jnp.zeros((N2_pad, H_pad), jnp.float32).at[:N2, :H].set(w2)
    b2p = jnp.zeros((N2_pad, 1), jnp.float32).at[:N2, 0].set(b2.reshape(-1))
    w3p = jnp.zeros((N2_pad, 1), jnp.float32).at[:N2, 0].set(w3.reshape(-1))
    b3p = b3.reshape(1, 1).astype(jnp.float32)
    return (w1p, b1p, w2p, b2p, w3p, b3p)


def bmm_v1_forward(x, prepared, num_classes: int, block_b: int = 512):
    """x: (B, feature_dim) float32. Returns (B,) like PyTorch's y.squeeze(1)."""
    assert block_b % LANE == 0, "batch tile must be a multiple of 128 lanes"
    w1p, b1p, w2p, b2p, w3p, b3p = prepared
    B, D = x.shape
    H_pad = w1p.shape[0]
    N2_pad = w2p.shape[0]

    TB = block_b
    B_pad = _round_up(max(B, TB), TB)
    # Transpose + zero-pad the batch so the kernel sees batch on the lane axis.
    xt = jnp.zeros((D, B_pad), x.dtype).at[:, :B].set(x.T)

    grid = (B_pad // TB,)
    const = lambda shape: pl.BlockSpec(shape, lambda i: (0, 0))   # resident weights

    out2d = pl.pallas_call(
        make_bmm_v1_kernel(num_classes),
        out_shape=jax.ShapeDtypeStruct((1, B_pad), jnp.float32),
        grid=grid,
        in_specs=[
            pl.BlockSpec((D, TB), lambda i: (0, i)),   # x^T, tiled over batch
            const((H_pad, D)),                         # fc1 weight (padded)
            const((H_pad, 1)),                         # fc1 bias
            const((N2_pad, H_pad)),                    # fc2 weight (padded)
            const((N2_pad, 1)),                        # fc2 bias
            const((N2_pad, 1)),                        # fc3 weight as a column
            pl.BlockSpec(memory_space=pltpu.MemorySpace.SMEM),  # fc3 bias scalar
        ],
        out_specs=pl.BlockSpec((1, TB), lambda i: (0, i)),       # lane-dense output
        compiler_params=pltpu.CompilerParams(
            dimension_semantics=("parallel",),         # batch tiles independent (v7x 2 TCs)
            vmem_limit_bytes=32 * 1024 * 1024,         # safe on v5e/v6e/v7x for these tiles
        ),
    )(xt, w1p, b1p, w2p, b2p, w3p, b3p)

    return out2d[0, :B]                                # squeeze(1) + drop batch padding


if __name__ == "__main__":
    num_classes = 2
    feature_dim = 32
    batch = 200            # not a multiple of the tile -> exercises batch padding

    key = jax.random.PRNGKey(0)
    kx, kp = jax.random.split(key)
    x = jax.random.normal(kx, (batch, feature_dim), jnp.float32)
    params = init_params(kp, feature_dim)
    prepared = prepare_params(params)

    # Small tile here so the demo runs a 2-step grid; use 512-2048 for large B
    # (re-derive against 64 MiB VMEM on v7x).
    y = bmm_v1_forward(x, prepared, num_classes, block_b=128)
    y = jax.block_until_ready(y)

    # sanity: pure-JAX reference on the original (unpadded, PyTorch-layout) params
    w1, b1, w2, b2, w3, b3 = params
    h1 = jnp.maximum(x @ w1.T + b1, 0.0)
    h2 = jnp.maximum(h1 @ w2.T + b2, 0.0)
    ref = (1.0 / (1.0 + jnp.exp(-(h2 @ w3.T + b3))))[:, 0]
    if num_classes == 2:
        ref = 2.0 * (ref - 0.5)
    assert y.shape == (batch,)
    assert jnp.allclose(y, ref, atol=1e-4, rtol=1e-4), (y, ref)

    print("KERNEL_OK")
</pallas_src>

<mosaic_0001>
module attributes {stable_mosaic.version = 11 : i64} {
  func.func @kernel(%arg0: i32, %arg1: memref<32x128xf32, #tpu.memory_space<vmem>>, %arg2: memref<128x32xf32, #tpu.memory_space<vmem>>, %arg3: memref<128x1xf32, #tpu.memory_space<vmem>>, %arg4: memref<128x128xf32, #tpu.memory_space<vmem>>, %arg5: memref<128x1xf32, #tpu.memory_space<vmem>>, %arg6: memref<128x1xf32, #tpu.memory_space<vmem>>, %arg7: memref<1x1xf32, #tpu.memory_space<smem>>, %arg8: memref<1x128xf32, #tpu.memory_space<vmem>>) attributes {dimension_semantics = [#tpu.dimension_semantics<parallel>], iteration_bounds = array<i64: 2>, scalar_prefetch = 0 : i64, scratch_operands = 0 : i64, tpu.core_type = #tpu.core_type<tc>, window_params = [{transform_indices = @transform_0, window_bounds = array<i64: 32, 128>}, {pipeline_mode = #tpu.pipeline_mode<synchronous>, transform_indices = @transform_1, window_bounds = array<i64: 128, 32>}, {pipeline_mode = #tpu.pipeline_mode<synchronous>, transform_indices = @transform_2, window_bounds = array<i64: 128, 1>}, {pipeline_mode = #tpu.pipeline_mode<synchronous>, transform_indices = @transform_3, window_bounds = array<i64: 128, 128>}, {pipeline_mode = #tpu.pipeline_mode<synchronous>, transform_indices = @transform_4, window_bounds = array<i64: 128, 1>}, {pipeline_mode = #tpu.pipeline_mode<synchronous>, transform_indices = @transform_5, window_bounds = array<i64: 128, 1>}, {transform_indices = @transform_6, window_bounds = array<i64: 1, 1>}, {transform_indices = @transform_7, window_bounds = array<i64: 1, 128>}]} {
    %c0 = arith.constant 0 : index
    %c0_0 = arith.constant 0 : index
    %0 = vector.load %arg1[%c0, %c0_0] : memref<32x128xf32, #tpu.memory_space<vmem>>, vector<32x128xf32>
    %c0_1 = arith.constant 0 : index
    %c0_2 = arith.constant 0 : index
    %1 = vector.load %arg2[%c0_1, %c0_2] : memref<128x32xf32, #tpu.memory_space<vmem>>, vector<128x32xf32>
    %cst = arith.constant dense<0.000000e+00> : vector<128x128xf32>
    %2 = tpu.matmul %1, %0, %cst {dimension_numbers = #tpu.dot_dimension_numbers<[1], [0], [0], [1], [0, 0, 1, 1], [], []>} : vector<128x32xf32>, vector<32x128xf32>, vector<128x128xf32> -> vector<128x128xf32>
    %c0_3 = arith.constant 0 : index
    %c0_4 = arith.constant 0 : index
    %3 = vector.load %arg3[%c0_3, %c0_4] : memref<128x1xf32, #tpu.memory_space<vmem>>, vector<128x1xf32>
    %4 = vector.broadcast %3 : vector<128x1xf32> to vector<128x128xf32>
    %5 = arith.addf %2, %4 : vector<128x128xf32>
    %cst_5 = arith.constant 0.000000e+00 : f32
    %6 = vector.broadcast %cst_5 : f32 to vector<128x128xf32>
    %7 = arith.maximumf %5, %6 : vector<128x128xf32>
    %c0_6 = arith.constant 0 : index
    %c0_7 = arith.constant 0 : index
    %8 = vector.load %arg4[%c0_6, %c0_7] : memref<128x128xf32, #tpu.memory_space<vmem>>, vector<128x128xf32>
    %cst_8 = arith.constant dense<0.000000e+00> : vector<128x128xf32>
    %9 = tpu.matmul %8, %7, %cst_8 {dimension_numbers = #tpu.dot_dimension_numbers<[1], [0], [0], [1], [0, 0, 1, 1], [], []>} : vector<128x128xf32>, vector<128x128xf32>, vector<128x128xf32> -> vector<128x128xf32>
    %c0_9 = arith.constant 0 : index
    %c0_10 = arith.constant 0 : index
    %10 = vector.load %arg5[%c0_9, %c0_10] : memref<128x1xf32, #tpu.memory_space<vmem>>, vector<128x1xf32>
    %11 = vector.broadcast %10 : vector<128x1xf32> to vector<128x128xf32>
    %12 = arith.addf %9, %11 : vector<128x128xf32>
    %cst_11 = arith.constant 0.000000e+00 : f32
    %13 = vector.broadcast %cst_11 : f32 to vector<128x128xf32>
    %14 = arith.maximumf %12, %13 : vector<128x128xf32>
    %c0_12 = arith.constant 0 : index
    %c0_13 = arith.constant 0 : index
    %15 = vector.load %arg6[%c0_12, %c0_13] : memref<128x1xf32, #tpu.memory_space<vmem>>, vector<128x1xf32>
    %16 = vector.broadcast %15 : vector<128x1xf32> to vector<128x128xf32>
    %17 = arith.mulf %14, %16 : vector<128x128xf32>
    %cst_14 = arith.constant dense<0.000000e+00> : vector<128xf32>
    %18 = vector.multi_reduction <add>, %17, %cst_14 [0] : vector<128x128xf32> to vector<128xf32>
    %19 = vector.shape_cast %18 : vector<128xf32> to vector<1x128xf32>
    %c0_15 = arith.constant 0 : index
    %c0_16 = arith.constant 0 : index
    %20 = memref.load %arg7[%c0_15, %c0_16] : memref<1x1xf32, #tpu.memory_space<smem>>
    %21 = vector.broadcast %20 : f32 to vector<1x128xf32>
    %22 = arith.addf %19, %21 : vector<1x128xf32>
    %cst_17 = arith.constant 0.000000e+00 : f32
    %23 = vector.broadcast %cst_17 : f32 to vector<1x128xf32>
    %24 = arith.subf %23, %22 : vector<1x128xf32>
    %25 = math.exp %24 : vector<1x128xf32>
    %cst_18 = arith.constant 1.000000e+00 : f32
    %26 = vector.broadcast %cst_18 : f32 to vector<1x128xf32>
    %27 = arith.addf %26, %25 : vector<1x128xf32>
    %28 = tpu.reciprocal %27 : vector<1x128xf32> -> vector<1x128xf32>
    %cst_19 = arith.constant 5.000000e-01 : f32
    %29 = vector.broadcast %cst_19 : f32 to vector<1x128xf32>
    %30 = arith.subf %28, %29 : vector<1x128xf32>
    %cst_20 = arith.constant 2.000000e+00 : f32
    %31 = vector.broadcast %cst_20 : f32 to vector<1x128xf32>
    %32 = arith.mulf %31, %30 : vector<1x128xf32>
    %c0_21 = arith.constant 0 : index
    %c0_22 = arith.constant 0 : index
    %33 = vector.load %arg8[%c0_21, %c0_22] : memref<1x128xf32, #tpu.memory_space<vmem>>, vector<1x128xf32>
    tpu.vector_store %arg8[%c0_21, %c0_22], %32 {strides = array<i32>} : memref<1x128xf32, #tpu.memory_space<vmem>>, vector<1x128xf32>,
    return
  }
  func.func @transform_0(%arg0: i32) -> (i32, i32) {
    %c0_i32 = arith.constant 0 : i32
    %c0_i32_0 = arith.constant 0 : i32
    return %c0_i32, %arg0 : i32, i32
  }
  func.func @transform_1(%arg0: i32) -> (i32, i32) {
    %c0_i32 = arith.constant 0 : i32
    %c0_i32_0 = arith.constant 0 : i32
    %c0_i32_1 = arith.constant 0 : i32
    return %c0_i32, %c0_i32_0 : i32, i32
  }
  func.func @transform_2(%arg0: i32) -> (i32, i32) {
    %c0_i32 = arith.constant 0 : i32
    %c0_i32_0 = arith.constant 0 : i32
    %c0_i32_1 = arith.constant 0 : i32
    return %c0_i32, %c0_i32_0 : i32, i32
  }
  func.func @transform_3(%arg0: i32) -> (i32, i32) {
    %c0_i32 = arith.constant 0 : i32
    %c0_i32_0 = arith.constant 0 : i32
    %c0_i32_1 = arith.constant 0 : i32
    return %c0_i32, %c0_i32_0 : i32, i32
  }
  func.func @transform_4(%arg0: i32) -> (i32, i32) {
    %c0_i32 = arith.constant 0 : i32
    %c0_i32_0 = arith.constant 0 : i32
    %c0_i32_1 = arith.constant 0 : i32
    return %c0_i32, %c0_i32_0 : i32, i32
  }
  func.func @transform_5(%arg0: i32) -> (i32, i32) {
    %c0_i32 = arith.constant 0 : i32
    %c0_i32_0 = arith.constant 0 : i32
    %c0_i32_1 = arith.constant 0 : i32
    return %c0_i32, %c0_i32_0 : i32, i32
  }
  func.func @transform_6(%arg0: i32) -> (i32, i32) {
    %c0_i32 = arith.constant 0 : i32
    %c0_i32_0 = arith.constant 0 : i32
    %c0_i32_1 = arith.constant 0 : i32
    return %c0_i32, %c0_i32_0 : i32, i32
  }
  func.func @transform_7(%arg0: i32) -> (i32, i32) {
    %c0_i32 = arith.constant 0 : i32
    %c0_i32_0 = arith.constant 0 : i32
    return %c0_i32, %arg0 : i32, i32
  }
}

</mosaic_0001>

<llo_original>
// kernel: tpu_custom_call.1
$region0: #{tpu_custom_call.1}
  #allocation0 [shape = 'u32[]', space=smem, size = 0x4, offset = 0x4, fixed_abs, tag = 'smem constant byte address 0x4 - core index']
  #allocation1 [shape = 'u32[72,128]{1,0:T(1,128)}', space=vmem, size = 0x9000, scoped, tag = 'internal scratch']
  #allocation2 [shape = 'f32[1,1]{1,0:T(1,128)S(6)}', space=smem, size = 0x200, scoped, tag = 'scoped memory for tpu_custom_call.1']
  %s0 = inlined_call_operand.vmem [shape: f32[32,256], index: 0, kind: input, shape index: {}]
  %s1 = inlined_call_operand.vmem [shape: f32[128,32], index: 1, kind: input, shape index: {}]
  %s2 = inlined_call_operand.vmem [shape: f32[128,1], index: 2, kind: input, shape index: {}]
  %s3 = inlined_call_operand.vmem [shape: f32[128,128], index: 3, kind: input, shape index: {}]
  %s4 = inlined_call_operand.vmem [shape: f32[128,1], index: 4, kind: input, shape index: {}]
  %s5 = inlined_call_operand.vmem [shape: f32[128,1], index: 5, kind: input, shape index: {}]
  %s6 = inlined_call_operand.<no memory space> [shape: f32[1,1], index: 6, kind: input, shape index: {}]
  %s7 = inlined_call_operand.hbm [shape: f32[1,256], index: 7, kind: output, shape index: {}]
  %s8 = sld [smem:[#allocation0]]
  $region99: #{tpu_custom_call.1} parent=0
    _
  %s10 = ssub.s32 1, %s8
  %s11 = scalar_select 0, %s10, %s8
  %12 = sst [smem:[#allocation2]] %s6
  $region1: #{tpu_custom_call.1} parent=0
    #allocation3 [shape = 'u8[32768]{0}', space=vmem, size = 0x8000, scoped, tag = 'input window, operand 0']
    #allocation4 [shape = 'u8[1024]{0}', space=vmem, size = 0x400, scoped, tag = 'output window, operand 0']
    #allocation5 [shape = 's32[2]{0}', space=sflag, size = 0x8, scoped, tag = 'scoped memory for tpu_custom_call.1']
    %13 = vsyncpa [#allocation5], 0
    %s14 = scalar_lea.sflag [#allocation5], 1
    %15 = vsyncpa %s14, 0
    loop: start=0, step=1, limit=4
    $region2: #{tpu_custom_call.1} parent=1 // loop_pre_header
      _
    $region3: #{tpu_custom_call.1} parent=1 // loop_header
      %s17 = sphi 0, %s21
      %p18 = scmp.ge.s32.totalorder %s17, 4
      %s27 = sphi 0, %s29
      %s30 = sphi 0, %s27
      %s31 = sphi 0, %s30
      %s47 = sphi 0, %s31
      %s51 = sphi 0, %s51
      %s53 = sphi 0, %s51
      %s54 = sphi 0, %s53
      %s68 = sphi 0, %s54
      %s72 = sphi 0, %s72
      %s74 = sphi 0, %s72
      %s75 = sphi 0, %s74
      %s89 = sphi 0, %s75
      %s93 = sphi 0, %s93
      %s95 = sphi 0, %s93
      %s96 = sphi 0, %s95
      %s110 = sphi 0, %s96
      %s114 = sphi 0, %s114
      %s116 = sphi 0, %s114
      %s117 = sphi 0, %s116
      %s131 = sphi 0, %s117
      %s135 = sphi 0, %s135
      %s137 = sphi 0, %s135
      %s138 = sphi 0, %s137
      %s152 = sphi 0, %s138
      %s156 = sphi 0, %s156
      %s158 = sphi 0, %s156
      %s159 = sphi 0, %s158
      %s173 = sphi 0, %s159
      %s179 = sphi 0, %s181
      %s182 = sphi 0, %s179
      %s183 = sphi 0, %s182
      %s199 = sphi 0, %s183
    $region4: #{tpu_custom_call.1} parent=1 // loop_header_branch
      %20 = sbr.rel (%p18) target = $region8
    $region5: #{tpu_custom_call.1} parent=1 // loop_body
      %s22 = ssub.s32 %s17, 1
      %s23 = ssub.s32 %s17, 2
      %s24 = sadd.s32 %s17, 1
      %s25 = ssub.s32 %s17, %s24
      %p26 = scmp.eq.s32.totalorder %s25, 0
      %s28 = sadd.s32 %s27, 1
      %s29 = scalar_select %p26, %s27, %s28
      %p32 = pneg %p26
      %p33 = scmp.eq.s32.totalorder %s17, 1
      %p34 = por %p32, %p33
      %p35 = scmp.ne.s32.totalorder %s27, %s30
      %p36 = scmp.eq.s32.totalorder %s17, 0
      %p37 = por %p35, %p36
      %p38 = scmp.ne.s32.totalorder %s27, %s30
      %p39 = scmp.eq.s32.totalorder %s22, 1
      %p40 = por %p38, %p39
      %p41 = scmp.ne.s32.totalorder %s30, %s31
      %p42 = scmp.eq.s32.totalorder %s22, 0
      %p43 = por %p41, %p42
      %p44 = scmp.ne.s32.totalorder %s30, %s31
      %p45 = scmp.eq.s32.totalorder %s23, 1
      %p46 = por %p44, %p45
      %p48 = scmp.ne.s32.totalorder %s31, %s47
      %p49 = scmp.eq.s32.totalorder %s23, 0
      %p50 = por %p48, %p49
      %s52 = sadd.s32 %s51, 1
      %p55 = scmp.eq.s32.totalorder %s17, 1
      %p56 = scmp.ne.s32.totalorder %s51, %s53
      %p57 = scmp.eq.s32.totalorder %s17, 0
      %p58 = por %p56, %p57
      %p59 = scmp.ne.s32.totalorder %s51, %s53
      %p60 = scmp.eq.s32.totalorder %s22, 1
      %p61 = por %p59, %p60
      %p62 = scmp.ne.s32.totalorder %s53, %s54
      %p63 = scmp.eq.s32.totalorder %s22, 0
      %p64 = por %p62, %p63
      %p65 = scmp.ne.s32.totalorder %s53, %s54
      %p66 = scmp.eq.s32.totalorder %s23, 1
      %p67 = por %p65, %p66
      %p69 = scmp.ne.s32.totalorder %s54, %s68
      %p70 = scmp.eq.s32.totalorder %s23, 0
      %p71 = por %p69, %p70
      %s73 = sadd.s32 %s72, 1
      %p76 = scmp.eq.s32.totalorder %s17, 1
      %p77 = scmp.ne.s32.totalorder %s72, %s74
      %p78 = scmp.eq.s32.totalorder %s17, 0
      %p79 = por %p77, %p78
      %p80 = scmp.ne.s32.totalorder %s72, %s74
      %p81 = scmp.eq.s32.totalorder %s22, 1
      %p82 = por %p80, %p81
      %p83 = scmp.ne.s32.totalorder %s74, %s75
      %p84 = scmp.eq.s32.totalorder %s22, 0
      %p85 = por %p83, %p84
      %p86 = scmp.ne.s32.totalorder %s74, %s75
      %p87 = scmp.eq.s32.totalorder %s23, 1
      %p88 = por %p86, %p87
      %p90 = scmp.ne.s32.totalorder %s75, %s89
      %p91 = scmp.eq.s32.totalorder %s23, 0
      %p92 = por %p90, %p91
      %s94 = sadd.s32 %s93, 1
      %p97 = scmp.eq.s32.totalorder %s17, 1
      %p98 = scmp.ne.s32.totalorder %s93, %s95
      %p99 = scmp.eq.s32.totalorder %s17, 0
      %p100 = por %p98, %p99
      %p101 = scmp.ne.s32.totalorder %s93, %s95
      %p102 = scmp.eq.s32.totalorder %s22, 1
      %p103 = por %p101, %p102
      %p104 = scmp.ne.s32.totalorder %s95, %s96
      %p105 = scmp.eq.s32.totalorder %s22, 0
      %p106 = por %p104, %p105
      %p107 = scmp.ne.s32.totalorder %s95, %s96
      %p108 = scmp.eq.s32.totalorder %s23, 1
      %p109 = por %p107, %p108
      %p111 = scmp.ne.s32.totalorder %s96, %s110
      %p112 = scmp.eq.s32.totalorder %s23, 0
      %p113 = por %p111, %p112
      %s115 = sadd.s32 %s114, 1
      %p118 = scmp.eq.s32.totalorder %s17, 1
      %p119 = scmp.ne.s32.totalorder %s114, %s116
      %p120 = scmp.eq.s32.totalorder %s17, 0
      %p121 = por %p119, %p120
      %p122 = scmp.ne.s32.totalorder %s114, %s116
      %p123 = scmp.eq.s32.totalorder %s22, 1
      %p124 = por %p122, %p123
      %p125 = scmp.ne.s32.totalorder %s116, %s117
      %p126 = scmp.eq.s32.totalorder %s22, 0
      %p127 = por %p125, %p126
      %p128 = scmp.ne.s32.totalorder %s116, %s117
      %p129 = scmp.eq.s32.totalorder %s23, 1
      %p130 = por %p128, %p129
      %p132 = scmp.ne.s32.totalorder %s117, %s131
      %p133 = scmp.eq.s32.totalorder %s23, 0
      %p134 = por %p132, %p133
      %s136 = sadd.s32 %s135, 1
      %p139 = scmp.eq.s32.totalorder %s17, 1
      %p140 = scmp.ne.s32.totalorder %s135, %s137
      %p141 = scmp.eq.s32.totalorder %s17, 0
      %p142 = por %p140, %p141
      %p143 = scmp.ne.s32.totalorder %s135, %s137
      %p144 = scmp.eq.s32.totalorder %s22, 1
      %p145 = por %p143, %p144
      %p146 = scmp.ne.s32.totalorder %s137, %s138
      %p147 = scmp.eq.s32.totalorder %s22, 0
      %p148 = por %p146, %p147
      %p149 = scmp.ne.s32.totalorder %s137, %s138
      %p150 = scmp.eq.s32.totalorder %s23, 1
      %p151 = por %p149, %p150
      %p153 = scmp.ne.s32.totalorder %s138, %s152
      %p154 = scmp.eq.s32.totalorder %s23, 0
      %p155 = por %p153, %p154
      %s157 = sadd.s32 %s156, 1
      %p160 = scmp.eq.s32.totalorder %s17, 1
      %p161 = scmp.ne.s32.totalorder %s156, %s158
      %p162 = scmp.eq.s32.totalorder %s17, 0
      %p163 = por %p161, %p162
      %p164 = scmp.ne.s32.totalorder %s156, %s158
      %p165 = scmp.eq.s32.totalorder %s22, 1
      %p166 = por %p164, %p165
      %p167 = scmp.ne.s32.totalorder %s158, %s159
      %p168 = scmp.eq.s32.totalorder %s22, 0
      %p169 = por %p167, %p168
      %p170 = scmp.ne.s32.totalorder %s158, %s159
      %p171 = scmp.eq.s32.totalorder %s23, 1
      %p172 = por %p170, %p171
      %p174 = scmp.ne.s32.totalorder %s159, %s173
      %p175 = scmp.eq.s32.totalorder %s23, 0
      %p176 = por %p174, %p175
      %s177 = ssub.s32 %s17, %s24
      %p178 = scmp.eq.s32.totalorder %s177, 0
      %s180 = sadd.s32 %s179, 1
      %s181 = scalar_select %p178, %s179, %s180
      %p184 = pneg %p178
      %p185 = scmp.eq.s32.totalorder %s17, 1
      %p186 = por %p184, %p185
      %p187 = scmp.ne.s32.totalorder %s179, %s182
      %p188 = scmp.eq.s32.totalorder %s17, 0
      %p189 = por %p187, %p188
      %p190 = scmp.ne.s32.totalorder %s179, %s182
      %p191 = scmp.eq.s32.totalorder %s22, 1
      %p192 = por %p190, %p191
      %p193 = scmp.ne.s32.totalorder %s182, %s183
      %p194 = scmp.eq.s32.totalorder %s22, 0
      %p195 = por %p193, %p194
      %p196 = scmp.ne.s32.totalorder %s182, %s183
      %p197 = scmp.eq.s32.totalorder %s23, 1
      %p198 = por %p196, %p197
      %p200 = scmp.ne.s32.totalorder %s183, %s199
      %p201 = scmp.eq.s32.totalorder %s23, 0
      %p202 = por %p200, %p201
      %p203 = scmp.le.s32.totalorder 1, %s17
      %p204 = scmp.lt.s32.totalorder %s17, 3
      %p205 = pnand %p203, %p204
      %p206 = pneg %p205
      // Predicated region
      $region9: #{tpu_custom_call.1} parent=5 // pred_check
        _
      $region10: #{tpu_custom_call.1} parent=5 // pred_check_branch
        %208 = sbr.rel (%p205) target = $region12
      $region11: #{tpu_custom_call.1} parent=5 // pred_region
        %s209 = ssub.s32 %s17, 1
        // Predicated region
        $region13: #{tpu_custom_call.1} parent=11 // pred_check
          %p210 = pneg %p64
        $region14: #{tpu_custom_call.1} parent=11 // pred_check_branch
          %212 = sbr.rel (%p210) target = $region16
        $region15: #{tpu_custom_call.1} parent=11 // pred_region
          _
        $region16: #{tpu_custom_call.1} parent=11 // pred_fallthru
          _
        // Predicated region
        $region17: #{tpu_custom_call.1} parent=11 // pred_check
          %p213 = pneg %p85
        $region18: #{tpu_custom_call.1} parent=11 // pred_check_branch
          %215 = sbr.rel (%p213) target = $region20
        $region19: #{tpu_custom_call.1} parent=11 // pred_region
          _
        $region20: #{tpu_custom_call.1} parent=11 // pred_fallthru
          _
        // Predicated region
        $region21: #{tpu_custom_call.1} parent=11 // pred_check
          %p216 = pneg %p106
        $region22: #{tpu_custom_call.1} parent=11 // pred_check_branch
          %218 = sbr.rel (%p216) target = $region24
        $region23: #{tpu_custom_call.1} parent=11 // pred_region
          _
        $region24: #{tpu_custom_call.1} parent=11 // pred_fallthru
          _
        // Predicated region
        $region25: #{tpu_custom_call.1} parent=11 // pred_check
          %p219 = pneg %p127
        $region26: #{tpu_custom_call.1} parent=11 // pred_check_branch
          %221 = sbr.rel (%p219) target = $region28
        $region27: #{tpu_custom_call.1} parent=11 // pred_region
          _
        $region28: #{tpu_custom_call.1} parent=11 // pred_fallthru
          _
        // Predicated region
        $region29: #{tpu_custom_call.1} parent=11 // pred_check
          %p222 = pneg %p148
        $region30: #{tpu_custom_call.1} parent=11 // pred_check_branch
          %224 = sbr.rel (%p222) target = $region32
        $region31: #{tpu_custom_call.1} parent=11 // pred_region
          _
        $region32: #{tpu_custom_call.1} parent=11 // pred_fallthru
          _
        // Predicated region
        $region33: #{tpu_custom_call.1} parent=11 // pred_check
          %p225 = pneg %p169
        $region34: #{tpu_custom_call.1} parent=11 // pred_check_branch
          %227 = sbr.rel (%p225) target = $region36
        $region35: #{tpu_custom_call.1} parent=11 // pred_region
          _
        $region36: #{tpu_custom_call.1} parent=11 // pred_fallthru
          _
      $region12: #{tpu_custom_call.1} parent=5 // pred_fallthru
        _
      %p228 = scmp.lt.s32.totalorder %s17, 2
      // Predicated region
      $region37: #{tpu_custom_call.1} parent=5 // pred_check
        %p229 = pneg %p228
      $region38: #{tpu_custom_call.1} parent=5 // pred_check_branch
        %231 = sbr.rel (%p229) target = $region40
      $region39: #{tpu_custom_call.1} parent=5 // pred_region
        // Predicated region
        $region41: #{tpu_custom_call.1} parent=39 // pred_check
          %p232 = pneg %p37
        $region42: #{tpu_custom_call.1} parent=39 // pred_check_branch
          %234 = sbr.rel (%p232) target = $region44
        $region43: #{tpu_custom_call.1} parent=39 // pred_region
          %s235 = sand.u32 %s27, 1
          %s236 = sand.u32 %s27, 1
          %s237 = smul.addr %s236, 32
          %s238 = scalar_lea.vmem [#allocation3], %s237
          %s239 = smul.addr %s17, 8
          %s240 = scalar_lea.vmem %s0, %s239
          // Predicated region
          $region45: #{tpu_custom_call.1} parent=43 // pred_check
            _
          $region46: #{tpu_custom_call.1} parent=43 // pred_check_branch
            %242 = sbr.rel (0) target = $region48
          $region47: #{tpu_custom_call.1} parent=43 // pred_region
            // Predicated region
            $region49: #{tpu_custom_call.1} parent=47 // pred_check
              _
            $region50: #{tpu_custom_call.1} parent=47 // pred_check_branch
              %244 = sbr.rel (0) target = $region52
            $region51: #{tpu_custom_call.1} parent=47 // pred_region
              // Predicated region
              $region64: #{tpu_custom_call.1} parent=51 // pred_check
                _
              $region65: #{tpu_custom_call.1} parent=51 // pred_check_branch
                %266 = sbr.rel (0) target = $region67
              $region66: #{tpu_custom_call.1} parent=51 // pred_region
                loop: start=0, step=1, limit=1
                $region68: #{tpu_custom_call.1} parent=66 // loop_pre_header
                  _
                $region69: #{tpu_custom_call.1} parent=66 // loop_header
                  %s268 = sphi 0, %s272
                  %p269 = scmp.ge.s32.totalorder %s268, 1
                  %s273 = sphi %s240, %s240
                  %s274 = sphi %s238, %s238
                $region70: #{tpu_custom_call.1} parent=66 // loop_header_branch
                  %271 = sbr.rel (%p269) target = $region74
                $region71: #{tpu_custom_call.1} parent=66 // loop_body
                  %v275 = vld [vmem:[%s273] sm:$0xff]
                  %276 = vst [vmem:[%s274] sm:$0xff] %v275
                  %v277 = vld [vmem:[%s273 + $0x10] sm:$0xff]
                  %278 = vst [vmem:[%s274 + $0x8] sm:$0xff] %v277
                  %v279 = vld [vmem:[%s273 + $0x20] sm:$0xff]
                  %280 = vst [vmem:[%s274 + $0x10] sm:$0xff] %v279
                  %v281 = vld [vmem:[%s273 + $0x30] sm:$0xff]
                  %282 = vst [vmem:[%s274 + $0x18] sm:$0xff] %v281
                $region72: #{tpu_custom_call.1} parent=66 // loop_footer
                  %s272 = sadd.s32 1, %s268
                $region73: #{tpu_custom_call.1} parent=66 // loop_footer_branch
                  %267 = sbr.rel target = $region69
                $region74: #{tpu_custom_call.1} parent=66 // loop_exit
                  _
              $region67: #{tpu_custom_call.1} parent=51 // pred_fallthru
                _
              // Predicated region
              $region75: #{tpu_custom_call.1} parent=51 // pred_check
                _
              $region76: #{tpu_custom_call.1} parent=51 // pred_check_branch
                %284 = sbr.rel target = $region78
              $region77: #{tpu_custom_call.1} parent=51 // pred_region
                _
              $region78: #{tpu_custom_call.1} parent=51 // pred_fallthru
                _
            $region52: #{tpu_custom_call.1} parent=47 // pred_fallthru
              _
            // Predicated region
            $region53: #{tpu_custom_call.1} parent=47 // pred_check
              _
            $region54: #{tpu_custom_call.1} parent=47 // pred_check_branch
              %246 = sbr.rel target = $region56
            $region55: #{tpu_custom_call.1} parent=47 // pred_region
              %s248 = ssub.s32 256, 1
              loop: start=0, step=1, limit=1
              $region57: #{tpu_custom_call.1} parent=55 // loop_pre_header
                _
              $region58: #{tpu_custom_call.1} parent=55 // loop_header
                %s250 = sphi 0, %s254
                %p251 = scmp.ge.s32.totalorder %s250, 1
                %s255 = sphi %s240, %s240
                %s256 = sphi %s238, %s238
              $region59: #{tpu_custom_call.1} parent=55 // loop_header_branch
                %253 = sbr.rel (%p251) target = $region63
              $region60: #{tpu_custom_call.1} parent=55 // loop_body
                %v257 = vld [vmem:[%s255] sm:%s248]
                %258 = vst [vmem:[%s256] sm:%s248] %v257
                %v259 = vld [vmem:[%s255 + $0x10] sm:%s248]
                %260 = vst [vmem:[%s256 + $0x8] sm:%s248] %v259
                %v261 = vld [vmem:[%s255 + $0x20] sm:%s248]
                %262 = vst [vmem:[%s256 + $0x10] sm:%s248] %v261
                %v263 = vld [vmem:[%s255 + $0x30] sm:%s248]
                %264 = vst [vmem:[%s256 + $0x18] sm:%s248] %v263
              $region61: #{tpu_custom_call.1} parent=55 // loop_footer
                %s254 = sadd.s32 1, %s250
              $region62: #{tpu_custom_call.1} parent=55 // loop_footer_branch
                %249 = sbr.rel target = $region58
              $region63: #{tpu_custom_call.1} parent=55 // loop_exit
                _
            $region56: #{tpu_custom_call.1} parent=47 // pred_fallthru
              _
          $region48: #{tpu_custom_call.1} parent=43 // pred_fallthru
            _
          %285 = vnop
        $region44: #{tpu_custom_call.1} parent=39 // pred_fallthru
          _
      $region40: #{tpu_custom_call.1} parent=5 // pred_fallthru
        _
      %p286 = scmp.le.s32.totalorder 1, %s17
      %p287 = scmp.lt.s32.totalorder %s17, 3
      %p288 = pnand %p286, %p287
      %p289 = pneg %p288
      // Predicated region
      $region79: #{tpu_custom_call.1} parent=5 // pred_check
        _
      $region80: #{tpu_custom_call.1} parent=5 // pred_check_branch
        %291 = sbr.rel (%p288) target = $region82
      $region81: #{tpu_custom_call.1} parent=5 // pred_region
        %s292 = ssub.s32 %s17, 1
        %s293 = sand.u32 %s30, 1
        %s294 = sand.u32 %s30, 1
        %s295 = smul.addr %s294, 32
        %s296 = scalar_lea.vmem [#allocation3], %s295
        // Predicated region
        $region83: #{tpu_custom_call.1} parent=81 // pred_check
          %p297 = pneg %p43
        $region84: #{tpu_custom_call.1} parent=81 // pred_check_branch
          %299 = sbr.rel (%p297) target = $region86
        $region85: #{tpu_custom_call.1} parent=81 // pred_region
          _
        $region86: #{tpu_custom_call.1} parent=81 // pred_fallthru
          _
        %s300 = sand.u32 %s30, 1
        %s301 = sand.u32 %s30, 1
        %s302 = smul.addr %s301, 32
        %s303 = scalar_lea.vmem [#allocation3], %s302
        %p304 = pneg %p43
        %p305 = pneg %p40
        %p306 = pneg %p64
        %p307 = pneg %p61
        %p308 = pneg %p85
        %p309 = pneg %p82
        %p310 = pneg %p106
        %p311 = pneg %p103
        %p312 = pneg %p127
        %p313 = pneg %p124
        %p314 = pneg %p148
        %p315 = pneg %p145
        %p316 = pneg %p169
        %p317 = pneg %p166
        %p318 = pneg %p195
        %p319 = pneg %p192
        %s320 = sand.u32 %s182, 1
        %s321 = scalar_lea.sflag [#allocation5], %s320
        %s322 = sand.u32 %s182, 1
        %s323 = scalar_lea.vmem [#allocation4], %s322
        %v324 = vld [vmem:[%s296] sm:$0xff]
        %v325 = vld [vmem:[%s296 + $0x8] sm:$0xff]
        %v326 = vld [vmem:[%s296 + $0x10] sm:$0xff]
        %v327 = vld [vmem:[%s296 + $0x18] sm:$0xff]
        %v328 = vld [vmem:[%s1] sm:$0xff]
        %v329 = vld [vmem:[%s1 + $0x8] sm:$0xff]
        %v330 = vld [vmem:[%s1 + $0x10] sm:$0xff]
        %v331 = vld [vmem:[%s1 + $0x18] sm:$0xff]
        %v332 = vld [vmem:[%s1 + $0x20] sm:$0xff]
        %v333 = vld [vmem:[%s1 + $0x28] sm:$0xff]
        %v334 = vld [vmem:[%s1 + $0x30] sm:$0xff]
        %v335 = vld [vmem:[%s1 + $0x38] sm:$0xff]
        %v336 = vld [vmem:[%s1 + $0x40] sm:$0xff]
        %v337 = vld [vmem:[%s1 + $0x48] sm:$0xff]
        %v338 = vld [vmem:[%s1 + $0x50] sm:$0xff]
        %v339 = vld [vmem:[%s1 + $0x58] sm:$0xff]
        %v340 = vld [vmem:[%s1 + $0x60] sm:$0xff]
        %v341 = vld [vmem:[%s1 + $0x68] sm:$0xff]
        %v342 = vld [vmem:[%s1 + $0x70] sm:$0xff]
        %v343 = vld [vmem:[%s1 + $0x78] sm:$0xff]
        %v344 = vld [vmem:[%s2] sm:$0xff]
        %v345 = vld [vmem:[%s2 + $0x8] sm:$0xff]
        %v346 = vld [vmem:[%s2 + $0x10] sm:$0xff]
        %v347 = vld [vmem:[%s2 + $0x18] sm:$0xff]
        %v348 = vld [vmem:[%s2 + $0x20] sm:$0xff]
        %v349 = vld [vmem:[%s2 + $0x28] sm:$0xff]
        %v350 = vld [vmem:[%s2 + $0x30] sm:$0xff]
        %v351 = vld [vmem:[%s2 + $0x38] sm:$0xff]
        %v352 = vld [vmem:[%s2 + $0x40] sm:$0xff]
        %v353 = vld [vmem:[%s2 + $0x48] sm:$0xff]
        %v354 = vld [vmem:[%s2 + $0x50] sm:$0xff]
        %v355 = vld [vmem:[%s2 + $0x58] sm:$0xff]
        %v356 = vld [vmem:[%s2 + $0x60] sm:$0xff]
        %v357 = vld [vmem:[%s2 + $0x68] sm:$0xff]
        %v358 = vld [vmem:[%s2 + $0x70] sm:$0xff]
        %v359 = vld [vmem:[%s2 + $0x78] sm:$0xff]
        %361 = vset.pattern.permute.xlu0 0
        %362 = vperm.xlu0 %361, %v344
        %v363 = vpop.permute.xlu0 %362
        %366 = vset.pattern.permute.xlu0 0
        %367 = vperm.xlu0 %366, %v345
        %v368 = vpop.permute.xlu0 %367
        %371 = vset.pattern.permute.xlu0 0
        %372 = vperm.xlu0 %371, %v346
        %v373 = vpop.permute.xlu0 %372
        %376 = vset.pattern.permute.xlu0 0
        %377 = vperm.xlu0 %376, %v347
        %v378 = vpop.permute.xlu0 %377
        %381 = vset.pattern.permute.xlu0 0
        %382 = vperm.xlu0 %381, %v348
        %v383 = vpop.permute.xlu0 %382
        %386 = vset.pattern.permute.xlu0 0
        %387 = vperm.xlu0 %386, %v349
        %v388 = vpop.permute.xlu0 %387
        %391 = vset.pattern.permute.xlu0 0
        %392 = vperm.xlu0 %391, %v350
        %v393 = vpop.permute.xlu0 %392
        %396 = vset.pattern.permute.xlu0 0
        %397 = vperm.xlu0 %396, %v351
        %v398 = vpop.permute.xlu0 %397
        %401 = vset.pattern.permute.xlu0 0
        %402 = vperm.xlu0 %401, %v352
        %v403 = vpop.permute.xlu0 %402
        %406 = vset.pattern.permute.xlu0 0
        %407 = vperm.xlu0 %406, %v353
        %v408 = vpop.permute.xlu0 %407
        %411 = vset.pattern.permute.xlu0 0
        %412 = vperm.xlu0 %411, %v354
        %v413 = vpop.permute.xlu0 %412
        %416 = vset.pattern.permute.xlu0 0
        %417 = vperm.xlu0 %416, %v355
        %v418 = vpop.permute.xlu0 %417
        %421 = vset.pattern.permute.xlu0 0
        %422 = vperm.xlu0 %421, %v356
        %v423 = vpop.permute.xlu0 %422
        %426 = vset.pattern.permute.xlu0 0
        %427 = vperm.xlu0 %426, %v357
        %v428 = vpop.permute.xlu0 %427
        %431 = vset.pattern.permute.xlu0 0
        %432 = vperm.xlu0 %431, %v358
        %v433 = vpop.permute.xlu0 %432
        %436 = vset.pattern.permute.xlu0 0
        %437 = vperm.xlu0 %436, %v359
        %v438 = vpop.permute.xlu0 %437
        %vm440 = vcmask 261120
        %v442 = vsel %vm440, %v328, 0
        %v445 = vsel %vm440, %v329, 0
        %v448 = vsel %vm440, %v330, 0
        %v451 = vsel %vm440, %v331, 0
        %v454 = vsel %vm440, %v332, 0
        %v457 = vsel %vm440, %v333, 0
        %v460 = vsel %vm440, %v334, 0
        %v463 = vsel %vm440, %v335, 0
        %v466 = vsel %vm440, %v336, 0
        %v469 = vsel %vm440, %v337, 0
        %v472 = vsel %vm440, %v338, 0
        %v475 = vsel %vm440, %v339, 0
        %v478 = vsel %vm440, %v340, 0
        %v481 = vsel %vm440, %v341, 0
        %v484 = vsel %vm440, %v342, 0
        %v487 = vsel %vm440, %v343, 0
        %489 = vmatpush.msra.mxu0 0.0
        %490 = vmatpush.msra.mxu0 0.0
        %491 = vmatpush.msra.mxu0 0.0
        %492 = vmatpush.msra.mxu0 0.0
        %493 = vmatpush.msra.mxu0 0.0
        %494 = vmatpush.msra.mxu0 0.0
        %495 = vmatpush.msra.mxu0 0.0
        %496 = vmatpush.msra.mxu0 0.0
        %497 = vmatpush.msra.mxu0 0.0
        %498 = vmatpush.msra.mxu0 0.0
        %499 = vmatpush.msra.mxu0 0.0
        %500 = vmatpush.msra.mxu0 0.0
        %501 = vmatpush.msra.mxu0 %v327
        %502 = vmatpush.msra.mxu0 %v326
        %503 = vmatpush.msra.mxu0 %v325
        %504 = vmatpush.msra.mxu0 %v324
        %505 = vmatmul.f32.gmra.mxu0 %v442
        %v506 = vpop.f32.mrf.mxu0
        %v507 = vadd.f32 %v363, %v506
        %508 = vmatmul.f32.gmra.mxu0 %v445
        %v509 = vpop.f32.mrf.mxu0
        %v510 = vadd.f32 %v368, %v509
        %511 = vmatmul.f32.gmra.mxu0 %v448
        %v512 = vpop.f32.mrf.mxu0
        %v513 = vadd.f32 %v373, %v512
        %514 = vmatmul.f32.gmra.mxu0 %v451
        %v515 = vpop.f32.mrf.mxu0
        %v516 = vadd.f32 %v378, %v515
        %517 = vmatmul.f32.gmra.mxu0 %v454
        %v518 = vpop.f32.mrf.mxu0
        %v519 = vadd.f32 %v383, %v518
        %520 = vmatmul.f32.gmra.mxu0 %v457
        %v521 = vpop.f32.mrf.mxu0
        %v522 = vadd.f32 %v388, %v521
        %523 = vmatmul.f32.gmra.mxu0 %v460
        %v524 = vpop.f32.mrf.mxu0
        %v525 = vadd.f32 %v393, %v524
        %526 = vmatmul.f32.gmra.mxu0 %v463
        %v527 = vpop.f32.mrf.mxu0
        %v528 = vadd.f32 %v398, %v527
        %529 = vmatmul.f32.gmra.mxu0 %v466
        %v530 = vpop.f32.mrf.mxu0
        %v531 = vadd.f32 %v403, %v530
        %532 = vmatmul.f32.gmra.mxu0 %v469
        %v533 = vpop.f32.mrf.mxu0
        %v534 = vadd.f32 %v408, %v533
        %535 = vmatmul.f32.gmra.mxu0 %v472
        %v536 = vpop.f32.mrf.mxu0
        %v537 = vadd.f32 %v413, %v536
        %538 = vmatmul.f32.gmra.mxu0 %v475
        %v539 = vpop.f32.mrf.mxu0
        %v540 = vadd.f32 %v418, %v539
        %541 = vmatmul.f32.gmra.mxu0 %v478
        %v542 = vpop.f32.mrf.mxu0
        %v543 = vadd.f32 %v423, %v542
        %544 = vmatmul.f32.gmra.mxu0 %v481
        %v545 = vpop.f32.mrf.mxu0
        %v546 = vadd.f32 %v428, %v545
        %547 = vmatmul.f32.gmra.mxu0 %v484
        %v548 = vpop.f32.mrf.mxu0
        %v549 = vadd.f32 %v433, %v548
        %550 = vmatmul.f32.gmra.mxu0 %v487
        %v551 = vpop.f32.mrf.mxu0
        %v552 = vadd.f32 %v438, %v551
        %553 = vdwg.mxu0
        %v554 = vmax.f32 %v507, 0.0
        %v555 = vmax.f32 %v510, 0.0
        %v556 = vmax.f32 %v513, 0.0
        %v557 = vmax.f32 %v516, 0.0
        %v558 = vmax.f32 %v519, 0.0
        %v559 = vmax.f32 %v522, 0.0
        %v560 = vmax.f32 %v525, 0.0
        %v561 = vmax.f32 %v528, 0.0
        %v562 = vmax.f32 %v531, 0.0
        %v563 = vmax.f32 %v534, 0.0
        %v564 = vmax.f32 %v537, 0.0
        %v565 = vmax.f32 %v540, 0.0
        %v566 = vmax.f32 %v543, 0.0
        %v567 = vmax.f32 %v546, 0.0
        %v568 = vmax.f32 %v549, 0.0
        %v569 = vmax.f32 %v552, 0.0
        %v570 = vld [vmem:[%s3] sm:$0xff]
        %v571 = vld [vmem:[%s3 + $0x8] sm:$0xff]
        %v572 = vld [vmem:[%s3 + $0x10] sm:$0xff]
        %v573 = vld [vmem:[%s3 + $0x18] sm:$0xff]
        %v574 = vld [vmem:[%s3 + $0x20] sm:$0xff]
        %v575 = vld [vmem:[%s3 + $0x28] sm:$0xff]
        %v576 = vld [vmem:[%s3 + $0x30] sm:$0xff]
        %v577 = vld [vmem:[%s3 + $0x38] sm:$0xff]
        %v578 = vld [vmem:[%s3 + $0x40] sm:$0xff]
        %v579 = vld [vmem:[%s3 + $0x48] sm:$0xff]
        %v580 = vld [vmem:[%s3 + $0x50] sm:$0xff]
        %v581 = vld [vmem:[%s3 + $0x58] sm:$0xff]
        %v582 = vld [vmem:[%s3 + $0x60] sm:$0xff]
        %v583 = vld [vmem:[%s3 + $0x68] sm:$0xff]
        %v584 = vld [vmem:[%s3 + $0x70] sm:$0xff]
        %v585 = vld [vmem:[%s3 + $0x78] sm:$0xff]
        %v586 = vld [vmem:[%s4] sm:$0xff]
        %v587 = vld [vmem:[%s4 + $0x8] sm:$0xff]
        %v588 = vld [vmem:[%s4 + $0x10] sm:$0xff]
        %v589 = vld [vmem:[%s4 + $0x18] sm:$0xff]
        %v590 = vld [vmem:[%s4 + $0x20] sm:$0xff]
        %v591 = vld [vmem:[%s4 + $0x28] sm:$0xff]
        %v592 = vld [vmem:[%s4 + $0x30] sm:$0xff]
        %v593 = vld [vmem:[%s4 + $0x38] sm:$0xff]
        %v594 = vld [vmem:[%s4 + $0x40] sm:$0xff]
        %v595 = vld [vmem:[%s4 + $0x48] sm:$0xff]
        %v596 = vld [vmem:[%s4 + $0x50] sm:$0xff]
        %v597 = vld [vmem:[%s4 + $0x58] sm:$0xff]
        %v598 = vld [vmem:[%s4 + $0x60] sm:$0xff]
        %v599 = vld [vmem:[%s4 + $0x68] sm:$0xff]
        %v600 = vld [vmem:[%s4 + $0x70] sm:$0xff]
        %v601 = vld [vmem:[%s4 + $0x78] sm:$0xff]
        %603 = vset.pattern.permute.xlu0 0
        %604 = vperm.xlu0 %603, %v586
        %v605 = vpop.permute.xlu0 %604
        %608 = vset.pattern.permute.xlu0 0
        %609 = vperm.xlu0 %608, %v587
        %v610 = vpop.permute.xlu0 %609
        %613 = vset.pattern.permute.xlu0 0
        %614 = vperm.xlu0 %613, %v588
        %v615 = vpop.permute.xlu0 %614
        %618 = vset.pattern.permute.xlu0 0
        %619 = vperm.xlu0 %618, %v589
        %v620 = vpop.permute.xlu0 %619
        %623 = vset.pattern.permute.xlu0 0
        %624 = vperm.xlu0 %623, %v590
        %v625 = vpop.permute.xlu0 %624
        %628 = vset.pattern.permute.xlu0 0
        %629 = vperm.xlu0 %628, %v591
        %v630 = vpop.permute.xlu0 %629
        %633 = vset.pattern.permute.xlu0 0
        %634 = vperm.xlu0 %633, %v592
        %v635 = vpop.permute.xlu0 %634
        %638 = vset.pattern.permute.xlu0 0
        %639 = vperm.xlu0 %638, %v593
        %v640 = vpop.permute.xlu0 %639
        %643 = vset.pattern.permute.xlu0 0
        %644 = vperm.xlu0 %643, %v594
        %v645 = vpop.permute.xlu0 %644
        %648 = vset.pattern.permute.xlu0 0
        %649 = vperm.xlu0 %648, %v595
        %v650 = vpop.permute.xlu0 %649
        %653 = vset.pattern.permute.xlu0 0
        %654 = vperm.xlu0 %653, %v596
        %v655 = vpop.permute.xlu0 %654
        %658 = vset.pattern.permute.xlu0 0
        %659 = vperm.xlu0 %658, %v597
        %v660 = vpop.permute.xlu0 %659
        %663 = vset.pattern.permute.xlu0 0
        %664 = vperm.xlu0 %663, %v598
        %v665 = vpop.permute.xlu0 %664
        %668 = vset.pattern.permute.xlu0 0
        %669 = vperm.xlu0 %668, %v599
        %v670 = vpop.permute.xlu0 %669
        %673 = vset.pattern.permute.xlu0 0
        %674 = vperm.xlu0 %673, %v600
        %v675 = vpop.permute.xlu0 %674
        %678 = vset.pattern.permute.xlu0 0
        %679 = vperm.xlu0 %678, %v601
        %v680 = vpop.permute.xlu0 %679
        %682 = vmatpush.msra.mxu0 %v569
        %683 = vmatpush.msra.mxu0 %v568
        %684 = vmatpush.msra.mxu0 %v567
        %685 = vmatpush.msra.mxu0 %v566
        %686 = vmatpush.msra.mxu0 %v565
        %687 = vmatpush.msra.mxu0 %v564
        %688 = vmatpush.msra.mxu0 %v563
        %689 = vmatpush.msra.mxu0 %v562
        %690 = vmatpush.msra.mxu0 %v561
        %691 = vmatpush.msra.mxu0 %v560
        %692 = vmatpush.msra.mxu0 %v559
        %693 = vmatpush.msra.mxu0 %v558
        %694 = vmatpush.msra.mxu0 %v557
        %695 = vmatpush.msra.mxu0 %v556
        %696 = vmatpush.msra.mxu0 %v555
        %697 = vmatpush.msra.mxu0 %v554
        %698 = vmatmul.f32.gmra.mxu0 %v570
        %v699 = vpop.f32.mrf.mxu0
        %v700 = vadd.f32 %v605, %v699
        %701 = vmatmul.f32.gmra.mxu0 %v571
        %v702 = vpop.f32.mrf.mxu0
        %v703 = vadd.f32 %v610, %v702
        %704 = vmatmul.f32.gmra.mxu0 %v572
        %v705 = vpop.f32.mrf.mxu0
        %v706 = vadd.f32 %v615, %v705
        %707 = vmatmul.f32.gmra.mxu0 %v573
        %v708 = vpop.f32.mrf.mxu0
        %v709 = vadd.f32 %v620, %v708
        %710 = vmatmul.f32.gmra.mxu0 %v574
        %v711 = vpop.f32.mrf.mxu0
        %v712 = vadd.f32 %v625, %v711
        %713 = vmatmul.f32.gmra.mxu0 %v575
        %v714 = vpop.f32.mrf.mxu0
        %v715 = vadd.f32 %v630, %v714
        %716 = vmatmul.f32.gmra.mxu0 %v576
        %v717 = vpop.f32.mrf.mxu0
        %v718 = vadd.f32 %v635, %v717
        %719 = vmatmul.f32.gmra.mxu0 %v577
        %v720 = vpop.f32.mrf.mxu0
        %v721 = vadd.f32 %v640, %v720
        %722 = vmatmul.f32.gmra.mxu0 %v578
        %v723 = vpop.f32.mrf.mxu0
        %v724 = vadd.f32 %v645, %v723
        %725 = vmatmul.f32.gmra.mxu0 %v579
        %v726 = vpop.f32.mrf.mxu0
        %v727 = vadd.f32 %v650, %v726
        %728 = vmatmul.f32.gmra.mxu0 %v580
        %v729 = vpop.f32.mrf.mxu0
        %v730 = vadd.f32 %v655, %v729
        %731 = vmatmul.f32.gmra.mxu0 %v581
        %v732 = vpop.f32.mrf.mxu0
        %v733 = vadd.f32 %v660, %v732
        %734 = vmatmul.f32.gmra.mxu0 %v582
        %v735 = vpop.f32.mrf.mxu0
        %v736 = vadd.f32 %v665, %v735
        %737 = vmatmul.f32.gmra.mxu0 %v583
        %v738 = vpop.f32.mrf.mxu0
        %v739 = vadd.f32 %v670, %v738
        %740 = vmatmul.f32.gmra.mxu0 %v584
        %v741 = vpop.f32.mrf.mxu0
        %v742 = vadd.f32 %v675, %v741
        %743 = vmatmul.f32.gmra.mxu0 %v585
        %v744 = vpop.f32.mrf.mxu0
        %v745 = vadd.f32 %v680, %v744
        %746 = vdwg.mxu0
        %v747 = vmax.f32 %v700, 0.0
        %v748 = vmax.f32 %v703, 0.0
        %v749 = vmax.f32 %v706, 0.0
        %v750 = vmax.f32 %v709, 0.0
        %v751 = vmax.f32 %v712, 0.0
        %v752 = vmax.f32 %v715, 0.0
        %v753 = vmax.f32 %v718, 0.0
        %v754 = vmax.f32 %v721, 0.0
        %v755 = vmax.f32 %v724, 0.0
        %v756 = vmax.f32 %v727, 0.0
        %v757 = vmax.f32 %v730, 0.0
        %v758 = vmax.f32 %v733, 0.0
        %v759 = vmax.f32 %v736, 0.0
        %v760 = vmax.f32 %v739, 0.0
        %v761 = vmax.f32 %v742, 0.0
        %v762 = vmax.f32 %v745, 0.0
        %v763 = vld [vmem:[%s5] sm:$0xff]
        %v764 = vld [vmem:[%s5 + $0x8] sm:$0xff]
        %v765 = vld [vmem:[%s5 + $0x10] sm:$0xff]
        %v766 = vld [vmem:[%s5 + $0x18] sm:$0xff]
        %v767 = vld [vmem:[%s5 + $0x20] sm:$0xff]
        %v768 = vld [vmem:[%s5 + $0x28] sm:$0xff]
        %v769 = vld [vmem:[%s5 + $0x30] sm:$0xff]
        %v770 = vld [vmem:[%s5 + $0x38] sm:$0xff]
        %v771 = vld [vmem:[%s5 + $0x40] sm:$0xff]
        %v772 = vld [vmem:[%s5 + $0x48] sm:$0xff]
        %v773 = vld [vmem:[%s5 + $0x50] sm:$0xff]
        %v774 = vld [vmem:[%s5 + $0x58] sm:$0xff]
        %v775 = vld [vmem:[%s5 + $0x60] sm:$0xff]
        %v776 = vld [vmem:[%s5 + $0x68] sm:$0xff]
        %v777 = vld [vmem:[%s5 + $0x70] sm:$0xff]
        %v778 = vld [vmem:[%s5 + $0x78] sm:$0xff]
        %780 = vset.pattern.permute.xlu0 0
        %781 = vperm.xlu0 %780, %v763
        %v782 = vpop.permute.xlu0 %781
        %785 = vset.pattern.permute.xlu0 0
        %786 = vperm.xlu0 %785, %v764
        %v787 = vpop.permute.xlu0 %786
        %790 = vset.pattern.permute.xlu0 0
        %791 = vperm.xlu0 %790, %v765
        %v792 = vpop.permute.xlu0 %791
        %795 = vset.pattern.permute.xlu0 0
        %796 = vperm.xlu0 %795, %v766
        %v797 = vpop.permute.xlu0 %796
        %800 = vset.pattern.permute.xlu0 0
        %801 = vperm.xlu0 %800, %v767
        %v802 = vpop.permute.xlu0 %801
        %805 = vset.pattern.permute.xlu0 0
        %806 = vperm.xlu0 %805, %v768
        %v807 = vpop.permute.xlu0 %806
        %810 = vset.pattern.permute.xlu0 0
        %811 = vperm.xlu0 %810, %v769
        %v812 = vpop.permute.xlu0 %811
        %815 = vset.pattern.permute.xlu0 0
        %816 = vperm.xlu0 %815, %v770
        %v817 = vpop.permute.xlu0 %816
        %820 = vset.pattern.permute.xlu0 0
        %821 = vperm.xlu0 %820, %v771
        %v822 = vpop.permute.xlu0 %821
        %825 = vset.pattern.permute.xlu0 0
        %826 = vperm.xlu0 %825, %v772
        %v827 = vpop.permute.xlu0 %826
        %830 = vset.pattern.permute.xlu0 0
        %831 = vperm.xlu0 %830, %v773
        %v832 = vpop.permute.xlu0 %831
        %835 = vset.pattern.permute.xlu0 0
        %836 = vperm.xlu0 %835, %v774
        %v837 = vpop.permute.xlu0 %836
        %840 = vset.pattern.permute.xlu0 0
        %841 = vperm.xlu0 %840, %v775
        %v842 = vpop.permute.xlu0 %841
        %845 = vset.pattern.permute.xlu0 0
        %846 = vperm.xlu0 %845, %v776
        %v847 = vpop.permute.xlu0 %846
        %850 = vset.pattern.permute.xlu0 0
        %851 = vperm.xlu0 %850, %v777
        %v852 = vpop.permute.xlu0 %851
        %855 = vset.pattern.permute.xlu0 0
        %856 = vperm.xlu0 %855, %v778
        %v857 = vpop.permute.xlu0 %856
        %v859 = vmul.f32 %v747, %v782
        %v860 = vmul.f32 %v748, %v787
        %v861 = vmul.f32 %v749, %v792
        %v862 = vmul.f32 %v750, %v797
        %v863 = vmul.f32 %v751, %v802
        %v864 = vmul.f32 %v752, %v807
        %v865 = vmul.f32 %v753, %v812
        %v866 = vmul.f32 %v754, %v817
        %v867 = vmul.f32 %v755, %v822
        %v868 = vmul.f32 %v756, %v827
        %v869 = vmul.f32 %v757, %v832
        %v870 = vmul.f32 %v758, %v837
        %v871 = vmul.f32 %v759, %v842
        %v872 = vmul.f32 %v760, %v847
        %v873 = vmul.f32 %v761, %v852
        %v874 = vmul.f32 %v762, %v857
        %v875 = vadd.f32 %v859, %v860
        %v876 = vadd.f32 %v875, %v861
        %v877 = vadd.f32 %v876, %v862
        %v878 = vadd.f32 %v877, %v863
        %v879 = vadd.f32 %v878, %v864
        %v880 = vadd.f32 %v879, %v865
        %v881 = vadd.f32 %v880, %v866
        %v882 = vadd.f32 %v881, %v867
        %v883 = vadd.f32 %v882, %v868
        %v884 = vadd.f32 %v883, %v869
        %v885 = vadd.f32 %v884, %v870
        %v886 = vadd.f32 %v885, %v871
        %v887 = vadd.f32 %v886, %v872
        %v888 = vadd.f32 %v887, %v873
        %v889 = vadd.f32 %v888, %v874
        %v890 = vrot.slane %v889, 4
        %v891 = vadd.f32 %v889, %v890
        %v892 = vrot.slane %v891, 2
        %v893 = vadd.f32 %v891, %v892
        %v894 = vrot.slane %v893, 1
        %v895 = vadd.f32 %v893, %v894
        %s896 = sld [smem:[#allocation2]]
        %v897 = vstv %s896
        %v898 = vadd.f32 %v895, %v897
        %v899 = vsub.f32 0.0, %v898
        %v900 = vmul.f32 %v899, 1.442695
        %v901 = vpow.pop %v900
        %v902 = vadd.f32 %v901, 1.0
        %v903 = vrcp.pop %v902
        %v904 = vmul.f32 %v902, %v903
        %v905 = vsub.f32 1.0, %v904
        %v906 = vmul.f32 %v903, %v905
        %v907 = vadd.f32 %v903, %v906
        %vm908 = vweird.f32 %v902
        %vm909 = vweird.f32 %v903
        %vm910 = vmor %vm908, %vm909
        %v911 = vsel %vm910, %v903, %v907
        %v912 = vand.u32 2147483647, %v902
        %vm913 = vcmp.eq.f32.partialorder %v912, 8.507059e+37
        %v914 = vand.u32 %v902, 2147483648
        %v915 = vor.u32 1.1754944e-38, %v914
        %v916 = vsel %vm913, %v915, %v911
        %v917 = vsub.f32 %v916, 0.5
        %v918 = vmul.f32 %v917, 2.0
        %919 = vst [vmem:[%s323] sm:$0x1] %v918
        %s920 = sand.u32 %s182, 1
        %s921 = scalar_lea.sflag [#allocation5], %s920
        %s922 = sand.u32 %s182, 1
        %s923 = scalar_lea.vmem [#allocation4], %s922
        // Predicated region
        $region87: #{tpu_custom_call.1} parent=81 // pred_check
          %p924 = pneg %p192
        $region88: #{tpu_custom_call.1} parent=81 // pred_check_branch
          %926 = sbr.rel (%p924) target = $region90
        $region89: #{tpu_custom_call.1} parent=81 // pred_region
          %928 = vsyncadd %s921, 0
          %s929 = scalar_lea.hbm %s7, %s22
          %s931 = sshll.u32 %s923, 4
          %s932 = int_to_ptr.vmem [resolvable:$true] %s931
          %s933 = sshll.u32 %s929, 4
          %s934 = int_to_ptr.hbm [resolvable:$true] %s933
          %936 = dma.vmem_to_hbm [thread:$0]  %s932, 16, %s934, %s921
        $region90: #{tpu_custom_call.1} parent=81 // pred_fallthru
          _
      $region82: #{tpu_custom_call.1} parent=5 // pred_fallthru
        _
      %p937 = scmp.le.s32.totalorder 2, %s17
      // Predicated region
      $region91: #{tpu_custom_call.1} parent=5 // pred_check
        %p938 = pneg %p937
      $region92: #{tpu_custom_call.1} parent=5 // pred_check_branch
        %940 = sbr.rel (%p938) target = $region94
      $region93: #{tpu_custom_call.1} parent=5 // pred_region
        %s941 = ssub.s32 %s17, 2
        // Predicated region
        $region95: #{tpu_custom_call.1} parent=93 // pred_check
          %p942 = pneg %p198
        $region96: #{tpu_custom_call.1} parent=93 // pred_check_branch
          %944 = sbr.rel (%p942) target = $region98
        $region97: #{tpu_custom_call.1} parent=93 // pred_region
          %s945 = sand.u32 %s183, 1
          %s946 = scalar_lea.sflag [#allocation5], %s945
          %s947 = sand.u32 %s183, 1
          %s948 = scalar_lea.vmem [#allocation4], %s947
          %950 = dma.done %s946, 16
        $region98: #{tpu_custom_call.1} parent=93 // pred_fallthru
          _
      $region94: #{tpu_custom_call.1} parent=5 // pred_fallthru
        _
    $region6: #{tpu_custom_call.1} parent=1 // loop_footer
      %s21 = sadd.s32 1, %s17
    $region7: #{tpu_custom_call.1} parent=1 // loop_footer_branch
      %16 = sbr.rel target = $region3
    $region8: #{tpu_custom_call.1} parent=1 // loop_exit
      _
    %951 = vsyncpa [#allocation5], 1
    %s952 = scalar_lea.sflag [#allocation5], 1
    %953 = vsyncpa %s952, 1

</llo_original>
